<compile_context>
chip_gen: v6e
topology: v6e:2x2x1
jax: 0.10.0
libtpu: 0.0.40
codegen_flags: <defaults>
</compile_context>

<pallas_src>
import functools

import jax
import jax.numpy as jnp
from jax.experimental import pallas as pl
from jax.experimental.pallas import tpu as pltpu


_PALLAS_MIN_ELEMENTS = 1 << 20  # below this, kernel launch overhead dominates
_LANE = 128
_MAX_BLOCK_ROWS = 2048          # block = (2048, 128) f32 = 1 MiB per input


def _cdiv(a: int, b: int) -> int:
    return -(-a // b)


# ----------------------------- elementwise terms ------------------------------

def _l1_term(x, y):
    return jnp.abs(x - y)


def _kl_term(mean, std):
    var = std * std
    return mean * mean + var - jnp.log(var) - 1.0


# --------------------------------- kernel -------------------------------------

def _pair_sum_kernel(term_fn, rows, br, inner, need_mask,
                     a_ref, b_ref, out_ref, acc_ref):
    """Accumulates sum(term_fn(a, b)) over the inner (reduction) grid axis."""
    pi = pl.program_id(0)
    ti = pl.program_id(1)

    @pl.when(ti == 0)
    def _():
        acc_ref[...] = jnp.zeros(acc_ref.shape, acc_ref.dtype)

    a = a_ref[...].astype(jnp.float32)
    b = b_ref[...].astype(jnp.float32)
    term = term_fn(a, b)  # elementwise (VPU) only in the hot loop

    if need_mask:
        # Boundary / duplicated blocks: zero out rows past the valid extent.
        # (OOB reads may be garbage/NaN; jnp.where is a select, so they never
        # reach the accumulator.)
        row0 = (pi * inner + ti) * br
        local = jax.lax.broadcasted_iota(jnp.int32, term.shape, 0)
        term = jnp.where(local + row0 < rows, term, 0.0)

    acc_ref[...] += term

    @pl.when(ti == pl.num_programs(1) - 1)
    def _():
        # Single cross-lane reduce + lane-dense (8,128) store, once per partial.
        out_ref[...] = jnp.broadcast_to(jnp.sum(acc_ref[...]), out_ref.shape)


def _pallas_pair_sum(term_fn, a, b, pad_a, pad_b):
    """Returns sum(term_fn(a, b)) over all elements as an f32 scalar.

    `pad_a` / `pad_b` must be values for which term_fn contributes exactly 0,
    used only for the (tiny, <128 element) lane-alignment pad.
    """
    n = a.size
    a_flat = a.reshape(-1)
    b_flat = b.reshape(-1)

    rem = (-n) % _LANE
    if rem:
        # Only a sub-128-element tail pad; never a full pad to block multiples.
        a_flat = jnp.pad(a_flat, (0, rem), constant_values=pad_a)
        b_flat = jnp.pad(b_flat, (0, rem), constant_values=pad_b)
    rows = (n + rem) // _LANE

    a2d = a_flat.reshape(rows, _LANE)
    b2d = b_flat.reshape(rows, _LANE)

    # Block rows: full extent when small, else 2048 (multiple of 8/16 for
    # f32/bf16 sublane packing).  Non-dividing row counts become one partially
    # out-of-bounds boundary block, masked inside the kernel.
    br = min(_MAX_BLOCK_ROWS, rows)
    tiles = _cdiv(rows, br)
    num_partials = 2 if tiles >= 2 else 1   # one partial per TensorCore on v7x
    inner = _cdiv(tiles, num_partials)
    # Mask needed if the last block is partial or the grid over-covers tiles.
    need_mask = (rows % br != 0) or (num_partials * inner != tiles)

    def in_idx(pi, ti):
        # Clamp so an over-covering grid step re-reads the last valid block
        # (its contribution is masked to zero in the kernel).
        return (jnp.minimum(pi * inner + ti, tiles - 1), 0)

    partials = pl.pallas_call(
        functools.partial(_pair_sum_kernel, term_fn, rows, br, inner, need_mask),
        out_shape=jax.ShapeDtypeStruct((num_partials, 8, 128), jnp.float32),
        grid_spec=pltpu.PrefetchScalarGridSpec(
            num_scalar_prefetch=0,
            grid=(num_partials, inner),
            in_specs=[
                pl.BlockSpec((br, _LANE), in_idx),
                pl.BlockSpec((br, _LANE), in_idx),
            ],
            out_specs=pl.BlockSpec((1, 8, 128), lambda pi, ti: (pi, 0, 0)),
            scratch_shapes=[pltpu.VMEM((br, _LANE), jnp.float32)],
        ),
        compiler_params=pltpu.CompilerParams(
            # Outer axis parallel (v7x dual-TC); inner reduction axis arbitrary.
            dimension_semantics=("parallel", "arbitrary"),
            vmem_limit_bytes=32 * 1024 * 1024,
        ),
    )(a2d, b2d)

    # Every element of a partial tile holds the same partial sum; take [0, 0].
    return jnp.sum(partials[:, 0, 0])


# ------------------------------- loss wrappers ---------------------------------

def l1_mean(x, y, *, min_pallas_elements=_PALLAS_MIN_ELEMENTS):
    """mean(|x - y|)."""
    if x.size < min_pallas_elements:
        return jnp.mean(jnp.abs(x.astype(jnp.float32) - y.astype(jnp.float32)))
    return _pallas_pair_sum(_l1_term, x, y, 0.0, 0.0) / jnp.float32(x.size)


def kl_divergence(mean, std, *, min_pallas_elements=_PALLAS_MIN_ELEMENTS):
    """(mean^2 + var - log(var) - 1).sum(dim=1).mean()  ==  total_sum / (numel/dim1)."""
    divisor = mean.size // mean.shape[1]
    if mean.size < min_pallas_elements:
        var = std.astype(jnp.float32) ** 2
        term = mean.astype(jnp.float32) ** 2 + var - jnp.log(var) - 1.0
        return term.sum(axis=1).mean()
    # Padding with (mean=0, std=1) contributes exactly 0 to the sum.
    return _pallas_pair_sum(_kl_term, mean, std, 0.0, 1.0) / jnp.float32(divisor)


def accumulate_value(inputs, update):
    out = dict(inputs)
    for k, v in update.items():
        if k in out:
            out[k] = out[k] + v
        else:
            out[k] = v
    return out


class DebugLossVae:
    """JAX/Pallas equivalent of the PyTorch DebugLossVae loss module."""

    def __init__(self, input_key: str, output_key: str, beta_kl: float = 1.0,
                 weight: float = 1.0,
                 min_pallas_elements: int = _PALLAS_MIN_ELEMENTS) -> None:
        self.input_key = input_key
        self.output_key = output_key
        self.beta_kl = beta_kl
        self.weight = weight
        self.min_pallas_elements = min_pallas_elements

    def __call__(self, inputs):
        l1 = l1_mean(inputs[self.input_key], inputs[self.output_key],
                     min_pallas_elements=self.min_pallas_elements)
        mean, std = inputs["latent_mean"], inputs["latent_std"]
        kl = kl_divergence(mean, std,
                           min_pallas_elements=self.min_pallas_elements)
        out = accumulate_value(
            inputs, {"generator_loss": self.weight * (l1 + self.beta_kl * kl)})
        out = dict(out)
        out["kl_divergence"] = kl
        return out


if __name__ == "__main__":
    key = jax.random.PRNGKey(0)
    k1, k2, k3, k4, k5, k6 = jax.random.split(key, 6)

    # Small shapes consistent with the module: waveform-like input/output and
    # an NCT latent.
    AB, AC, AT = 2, 1, 128      # reconstruction tensors
    B, C, T = 2, 4, 16          # latent tensors

    audio = jax.random.normal(k1, (AB, AC, AT), dtype=jnp.float32)
    audio_pred = audio + 0.1 * jax.random.normal(k2, (AB, AC, AT), dtype=jnp.float32)
    latent_mean = jax.random.normal(k3, (B, C, T), dtype=jnp.float32)
    # std must be positive (log of var)
    latent_std = jax.nn.softplus(
        jax.random.normal(k4, (B, C, T), dtype=jnp.float32)) + 0.1

    inputs = {
        "audio": audio,
        "audio_pred": audio_pred,
        "latent_mean": latent_mean,
        "latent_std": latent_std,
        # pre-existing generator_loss to exercise accumulate_value path
        "generator_loss": jnp.float32(0.25),
    }

    beta_kl, weight = 0.5, 2.0
    # min_pallas_elements=0 forces the Pallas kernels even at these tiny demo
    # shapes (the default threshold dispatches tiny inputs to plain XLA).
    loss_mod = DebugLossVae("audio", "audio_pred", beta_kl=beta_kl, weight=weight,
                            min_pallas_elements=0)
    outputs = loss_mod(inputs)
    jax.block_until_ready(outputs["kl_divergence"])
    jax.block_until_ready(outputs["generator_loss"])

    # Pure-JAX reference check (tiny shapes, single-block path).
    l1_ref = jnp.mean(jnp.abs(audio - audio_pred))
    var = latent_std ** 2
    kl_ref = (latent_mean ** 2 + var - jnp.log(var) - 1.0).sum(axis=1).mean()
    gen_ref = 0.25 + weight * (l1_ref + beta_kl * kl_ref)

    assert jnp.allclose(outputs["kl_divergence"], kl_ref, rtol=1e-5, atol=1e-5), (
        outputs["kl_divergence"], kl_ref)
    assert jnp.allclose(outputs["generator_loss"], gen_ref, rtol=1e-5, atol=1e-5), (
        outputs["generator_loss"], gen_ref)

    # Medium-size self-check: rows=4104 -> 3 tiles of 2048 rows, 2 partials,
    # exercises the boundary-block mask and the grid-clamp (duplicate step) path.
    xm = jax.random.normal(k5, (2, 2052, 128), dtype=jnp.float32)
    ym = xm + 0.05 * jax.random.normal(k6, (2, 2052, 128), dtype=jnp.float32)
    l1_big = l1_mean(xm, ym, min_pallas_elements=0)
    jax.block_until_ready(l1_big)
    l1_big_ref = jnp.mean(jnp.abs(xm - ym))
    assert jnp.allclose(l1_big, l1_big_ref, rtol=1e-4, atol=1e-6), (l1_big, l1_big_ref)

    print("KERNEL_OK")
</pallas_src>

<mosaic_0001>
module attributes {stable_mosaic.version = 11 : i64} {
  func.func @_pair_sum_kernel(%arg0: i32, %arg1: i32, %arg2: memref<2x128xf32, #tpu.memory_space<vmem>>, %arg3: memref<2x128xf32, #tpu.memory_space<vmem>>, %arg4: memref<1x8x128xf32, #tpu.memory_space<vmem>>, %arg5: memref<2x128xf32, #tpu.memory_space<vmem>>) attributes {dimension_semantics = [#tpu.dimension_semantics<parallel>, #tpu.dimension_semantics<arbitrary>], iteration_bounds = array<i64: 1, 1>, scalar_prefetch = 0 : i64, scratch_operands = 1 : i64, tpu.core_type = #tpu.core_type<tc>, window_params = [{transform_indices = @transform_0, window_bounds = array<i64: 2, 128>}, {transform_indices = @transform_1, window_bounds = array<i64: 2, 128>}, {transform_indices = @transform_2, window_bounds = array<i64: 1, 8, 128>}]} {
    %c0_i32 = arith.constant 0 : i32
    %0 = arith.cmpi eq, %arg1, %c0_i32 : i32
    %1 = arith.extui %0 : i1 to i32
    %c0_i32_0 = arith.constant 0 : i32
    %2 = arith.cmpi ne, %1, %c0_i32_0 : i32
    scf.if %2 {
      %cst = arith.constant 0.000000e+00 : f32
      %13 = vector.broadcast %cst : f32 to vector<2x128xf32>
      %c0_10 = arith.constant 0 : index
      %c0_11 = arith.constant 0 : index
      %14 = vector.load %arg5[%c0_10, %c0_11] : memref<2x128xf32, #tpu.memory_space<vmem>>, vector<2x128xf32>
      tpu.vector_store %arg5[%c0_10, %c0_11], %13 {strides = array<i32>} : memref<2x128xf32, #tpu.memory_space<vmem>>, vector<2x128xf32>,
    } else {
    }
    %c0 = arith.constant 0 : index
    %c0_1 = arith.constant 0 : index
    %3 = vector.load %arg2[%c0, %c0_1] : memref<2x128xf32, #tpu.memory_space<vmem>>, vector<2x128xf32>
    %c0_2 = arith.constant 0 : index
    %c0_3 = arith.constant 0 : index
    %4 = vector.load %arg3[%c0_2, %c0_3] : memref<2x128xf32, #tpu.memory_space<vmem>>, vector<2x128xf32>
    %5 = arith.subf %3, %4 : vector<2x128xf32>
    %6 = math.absf %5 : vector<2x128xf32>
    %c0_4 = arith.constant 0 : index
    %c0_5 = arith.constant 0 : index
    %7 = vector.load %arg5[%c0_4, %c0_5] : memref<2x128xf32, #tpu.memory_space<vmem>>, vector<2x128xf32>
    %8 = arith.addf %7, %6 : vector<2x128xf32>
    %c0_6 = arith.constant 0 : index
    %c0_7 = arith.constant 0 : index
    %9 = vector.load %arg5[%c0_6, %c0_7] : memref<2x128xf32, #tpu.memory_space<vmem>>, vector<2x128xf32>
    tpu.vector_store %arg5[%c0_6, %c0_7], %8 {strides = array<i32>} : memref<2x128xf32, #tpu.memory_space<vmem>>, vector<2x128xf32>,
    %c0_i32_8 = arith.constant 0 : i32
    %10 = arith.cmpi eq, %arg1, %c0_i32_8 : i32
    %11 = arith.extui %10 : i1 to i32
    %c0_i32_9 = arith.constant 0 : i32
    %12 = arith.cmpi ne, %11, %c0_i32_9 : i32
    scf.if %12 {
      %c0_10 = arith.constant 0 : index
      %c0_11 = arith.constant 0 : index
      %13 = vector.load %arg5[%c0_10, %c0_11] : memref<2x128xf32, #tpu.memory_space<vmem>>, vector<2x128xf32>
      %14 = vector.shape_cast %13 : vector<2x128xf32> to vector<1x2x128xf32>
      %cst = arith.constant dense<0.000000e+00> : vector<1xf32>
      %15 = vector.multi_reduction <add>, %14, %cst [1, 2] : vector<1x2x128xf32> to vector<1xf32>
      %16 = vector.shape_cast %15 : vector<1xf32> to vector<1x1x1xf32>
      %17 = vector.extract %16[0, 0, 0] : f32 from vector<1x1x1xf32>
      %18 = vector.broadcast %17 : f32 to vector<1x8x128xf32>
      %c0_12 = arith.constant 0 : index
      %c0_13 = arith.constant 0 : index
      %c0_14 = arith.constant 0 : index
      %19 = vector.load %arg4[%c0_12, %c0_13, %c0_14] : memref<1x8x128xf32, #tpu.memory_space<vmem>>, vector<1x8x128xf32>
      tpu.vector_store %arg4[%c0_12, %c0_13, %c0_14], %18 {strides = array<i32>} : memref<1x8x128xf32, #tpu.memory_space<vmem>>, vector<1x8x128xf32>,
    } else {
    }
    return
  }
  func.func @transform_0(%arg0: i32, %arg1: i32) -> (i32, i32) {
    %c1_i32 = arith.constant 1 : i32
    %0 = arith.muli %arg0, %c1_i32 : i32
    %1 = arith.addi %0, %arg1 : i32
    %c0_i32 = arith.constant 0 : i32
    %2 = arith.minsi %1, %c0_i32 : i32
    %c0_i32_0 = arith.constant 0 : i32
    %c0_i32_1 = arith.constant 0 : i32
    return %2, %c0_i32_0 : i32, i32
  }
  func.func @transform_1(%arg0: i32, %arg1: i32) -> (i32, i32) {
    %c1_i32 = arith.constant 1 : i32
    %0 = arith.muli %arg0, %c1_i32 : i32
    %1 = arith.addi %0, %arg1 : i32
    %c0_i32 = arith.constant 0 : i32
    %2 = arith.minsi %1, %c0_i32 : i32
    %c0_i32_0 = arith.constant 0 : i32
    %c0_i32_1 = arith.constant 0 : i32
    return %2, %c0_i32_0 : i32, i32
  }
  func.func @transform_2(%arg0: i32, %arg1: i32) -> (i32, i32, i32) {
    %c0_i32 = arith.constant 0 : i32
    %c0_i32_0 = arith.constant 0 : i32
    %c0_i32_1 = arith.constant 0 : i32
    return %arg0, %c0_i32, %c0_i32_0 : i32, i32, i32
  }
}

</mosaic_0001>

<llo_original>
// kernel: tpu_custom_call.1
$region0: #{tpu_custom_call.1}
  #allocation0 [shape = 'u32[]', space=smem, size = 0x4, offset = 0x4, fixed_abs, tag = 'smem constant byte address 0x4 - core index']
  #allocation1 [shape = 'u32[144,128]{1,0:T(1,128)}', space=vmem, size = 0x12000, scoped, tag = 'internal scratch']
  #allocation2 [shape = 'f32[2,128]{1,0:T(2,128)}', space=vmem, size = 0x400, scoped, tag = 'scratch operand']
  %s0 = inlined_call_operand.hbm [shape: f32[2,128], index: 0, kind: input, shape index: {}]
  %s1 = inlined_call_operand.hbm [shape: f32[2,128], index: 1, kind: input, shape index: {}]
  %s2 = inlined_call_operand.hbm [shape: f32[1,8,128], index: 2, kind: output, shape index: {}]
  %s3 = sld [smem:[#allocation0]]
  $region34: #{tpu_custom_call.1} parent=0
    _
  %s5 = ssub.s32 1, %s3
  %s6 = scalar_select 0, %s5, %s3
  $region1: #{tpu_custom_call.1} parent=0
    #allocation3 [shape = 'u8[1024]{0}', space=vmem, size = 0x400, scoped, tag = 'input window, operand 0, single buffered']
    #allocation4 [shape = 's32[1]{0}', space=sflag, size = 0x4, scoped, tag = 'scoped memory for tpu_custom_call.1']
    #allocation5 [shape = 's32[1]{0}', space=sflag, size = 0x4, scoped, tag = 'scoped memory for tpu_custom_call.1']
    #allocation6 [shape = 'u8[1024]{0}', space=vmem, size = 0x400, scoped, tag = 'input window, operand 1, single buffered']
    #allocation7 [shape = 's32[1]{0}', space=sflag, size = 0x4, scoped, tag = 'scoped memory for tpu_custom_call.1']
    #allocation8 [shape = 'u8[4096]{0}', space=vmem, size = 0x1000, scoped, tag = 'output window, operand 0, single buffered']
    %7 = vsyncpa [#allocation4], 0
    %8 = vsyncpa [#allocation7], 0
    %9 = vsyncpa [#allocation5], 0
    // Predicated region
    $region2: #{tpu_custom_call.1} parent=1 // pred_check
      _
    $region3: #{tpu_custom_call.1} parent=1 // pred_check_branch
      %11 = sbr.rel (0) target = $region5
    $region4: #{tpu_custom_call.1} parent=1 // pred_region
      %s12 = sadd.s32 0, 0
      %p13 = scmp.lt.s32.totalorder %s12, 0
      %s14 = scalar_select %p13, %s12, 0
      %s16 = ssub.s32 32, 32
      %17 = vsyncadd [#allocation4], %s16
      %s18 = smul.addr %s14, 32
      %s19 = scalar_lea.hbm %s0, %s18
      %s21 = sshll.u32 [#allocation3], 4
      %s22 = int_to_ptr.vmem [resolvable:$true] %s21
      %24 = dma.hbm_to_vmem [thread:$0]  %s19, 32, %s22, [#allocation4]
    $region5: #{tpu_custom_call.1} parent=1 // pred_fallthru
      _
    // Predicated region
    $region6: #{tpu_custom_call.1} parent=1 // pred_check
      _
    $region7: #{tpu_custom_call.1} parent=1 // pred_check_branch
      %26 = sbr.rel (0) target = $region9
    $region8: #{tpu_custom_call.1} parent=1 // pred_region
      %s27 = sadd.s32 0, 0
      %p28 = scmp.lt.s32.totalorder %s27, 0
      %s29 = scalar_select %p28, %s27, 0
      %s31 = ssub.s32 32, 32
      %32 = vsyncadd [#allocation7], %s31
      %s33 = smul.addr %s29, 32
      %s34 = scalar_lea.hbm %s1, %s33
      %s36 = sshll.u32 [#allocation6], 4
      %s37 = int_to_ptr.vmem [resolvable:$true] %s36
      %39 = dma.hbm_to_vmem [thread:$0]  %s34, 32, %s37, [#allocation7]
    $region9: #{tpu_custom_call.1} parent=1 // pred_fallthru
      _
    // Predicated region
    $region10: #{tpu_custom_call.1} parent=1 // pred_check
      _
    $region11: #{tpu_custom_call.1} parent=1 // pred_check_branch
      %41 = sbr.rel (0) target = $region13
    $region12: #{tpu_custom_call.1} parent=1 // pred_region
      %42 = dma.done [#allocation4], 32
    $region13: #{tpu_custom_call.1} parent=1 // pred_fallthru
      _
    // Predicated region
    $region14: #{tpu_custom_call.1} parent=1 // pred_check
      _
    $region15: #{tpu_custom_call.1} parent=1 // pred_check_branch
      %44 = sbr.rel (0) target = $region17
    $region16: #{tpu_custom_call.1} parent=1 // pred_region
      %45 = dma.done [#allocation7], 32
    $region17: #{tpu_custom_call.1} parent=1 // pred_fallthru
      _
    %s46 = sadd.s32 0, 0
    %p47 = scmp.lt.s32.totalorder %s46, 0
    %s48 = scalar_select %p47, %s46, 0
    %s49 = sadd.s32 0, 0
    %p50 = scmp.lt.s32.totalorder %s49, 0
    %s51 = scalar_select %p50, %s49, 0
    %p52 = scmp.eq.s32.totalorder 0, 0
    // Predicated region
    $region18: #{tpu_custom_call.1} parent=1 // pred_check
      %p53 = pneg %p52
    $region19: #{tpu_custom_call.1} parent=1 // pred_check_branch
      %55 = sbr.rel (%p53) target = $region21
    $region20: #{tpu_custom_call.1} parent=1 // pred_region
      %56 = vst [vmem:[#allocation2] sm:$0x3] 0.0
    $region21: #{tpu_custom_call.1} parent=1 // pred_fallthru
      _
    %v57 = vld [vmem:[#allocation3] sm:$0x3]
    %v58 = vld [vmem:[#allocation6] sm:$0x3]
    %v59 = vsub.f32 %v57, %v58
    %v60 = vand.u32 2147483647, %v59
    %v61 = vld [vmem:[#allocation2] sm:$0x3]
    %v62 = vadd.f32 %v61, %v60
    %63 = vst [vmem:[#allocation2] sm:$0x3] %v62
    // Predicated region
    $region22: #{tpu_custom_call.1} parent=1 // pred_check
      %p64 = pneg %p52
    $region23: #{tpu_custom_call.1} parent=1 // pred_check_branch
      %66 = sbr.rel (%p64) target = $region25
    $region24: #{tpu_custom_call.1} parent=1 // pred_region
      %v67 = vld [vmem:[#allocation2] sm:$0x3]
      %vm68 = vcmask 1041408
      %v69 = vsel %vm68, %v67, 0.0
      %70 = vadd.xlane.f32.xlu0 %v69
      %v71 = vpop.xlane.xlu0 %70
      %v72 = vrot.slane %v71, 4
      %v73 = vadd.f32 %v71, %v72
      %v74 = vrot.slane %v73, 2
      %v75 = vadd.f32 %v73, %v74
      %v76 = vrot.slane %v75, 1
      %v77 = vadd.f32 %v75, %v76
      %s78 = vtos %v77
      %v79 = vstv %s78
      %80 = vst [vmem:[#allocation8] sm:$0xff] %v79
    $region25: #{tpu_custom_call.1} parent=1 // pred_fallthru
      _
    // Predicated region
    $region26: #{tpu_custom_call.1} parent=1 // pred_check
      _
    $region27: #{tpu_custom_call.1} parent=1 // pred_check_branch
      %82 = sbr.rel (0) target = $region29
    $region28: #{tpu_custom_call.1} parent=1 // pred_region
      %s84 = ssub.s32 128, 128
      %85 = vsyncadd [#allocation5], %s84
      %s87 = sshll.u32 [#allocation8], 4
      %s88 = int_to_ptr.vmem [resolvable:$true] %s87
      %90 = dma.vmem_to_hbm [thread:$0]  %s88, 128, %s2, [#allocation5]
    $region29: #{tpu_custom_call.1} parent=1 // pred_fallthru
      _
    // Predicated region
    $region30: #{tpu_custom_call.1} parent=1 // pred_check
      _
    $region31: #{tpu_custom_call.1} parent=1 // pred_check_branch
      %92 = sbr.rel (0) target = $region33
    $region32: #{tpu_custom_call.1} parent=1 // pred_region
      %93 = dma.done [#allocation5], 128
    $region33: #{tpu_custom_call.1} parent=1 // pred_fallthru
      _
    %94 = vsyncpa [#allocation4], 1
    %95 = vsyncpa [#allocation7], 1
    %96 = vsyncpa [#allocation5], 1

</llo_original>
